<compile_context>
chip_gen: v6e
topology: v6e:2x2x1
jax: 0.10.0
libtpu: 0.0.40
codegen_flags: <defaults>
</compile_context>

<pallas_src>
import functools

import jax
import jax.numpy as jnp
from jax import lax
from jax.experimental import pallas as pl
from jax.experimental.pallas import tpu as pltpu


def _sparse_cov_kernel(w_ref, xl_ref, xr_ref, o_ref, acc_ref, *,
                       tdi, tdj, compute_dtype):
    # All grid queries hoisted to the top level (NOT inside pl.when bodies).
    i = pl.program_id(0)           # output-row tile
    j = pl.program_id(1)           # output-col tile
    k = pl.program_id(2)           # reduction (N) tile — innermost
    nk = pl.num_programs(2)

    @pl.when(k == 0)
    def _init():
        acc_ref[...] = jnp.zeros_like(acc_ref)

    # Partial Gram block: x[:, i_blk].T @ x[:, j_blk], contracting the row (N)
    # axis of both operands.  bf16 operands (when input is f32) for the
    # 256-wide MXU; accumulation stays f32.
    # (If the Mosaic bundle shows a per-step vxpose of the lhs block, the
    #  wrapper-side pre-transpose of x is the next optimization to apply.)
    xl = xl_ref[...].astype(compute_dtype)
    xr = xr_ref[...].astype(compute_dtype)
    acc_ref[...] += lax.dot_general(
        xl, xr,
        dimension_numbers=(((0,), (0,)), ((), ())),
        preferred_element_type=jnp.float32,
    )

    is_last = k == nk - 1
    row0 = i * tdi
    col0 = j * tdj
    # Does this (i, j) output tile intersect the diagonal of the (D, D) result?
    diag_hit = jnp.logical_and(row0 < col0 + tdj, col0 < row0 + tdi)

    @pl.when(jnp.logical_and(is_last, diag_hit))
    def _finalize_diag():
        cov = acc_ref[...]
        row = lax.broadcasted_iota(jnp.int32, cov.shape, 0) + row0
        col = lax.broadcasted_iota(jnp.int32, cov.shape, 1) + col0
        eye = (row == col).astype(jnp.float32)
        masked = cov * eye                     # cov*I == I*cov elementwise
        # weightage * (cov*I - I*cov) — exactly zero, computed faithfully.
        o_ref[...] = (w_ref[0] * (masked - masked)).astype(o_ref.dtype)

    @pl.when(jnp.logical_and(is_last, jnp.logical_not(diag_hit)))
    def _finalize_off_diag():
        # Off-diagonal tiles: cov*I and I*cov are exactly zero here, so no
        # iota/mask/compare work is needed.
        o_ref[...] = jnp.zeros_like(o_ref)


def _round_up(x, m):
    return ((x + m - 1) // m) * m


def _pick_reduction_tile(n):
    cands = (1024, 512, 256, 128, 64, 32, 16, 8)
    for c in cands:            # prefer an exact divisor (no padding)
        if n % c == 0:
            return c
    for c in cands:            # otherwise largest tile <= n, pad up
        if c <= n:
            return c
    return 8


def sparse_covariance(x, weightage):
    """x: (N, D). Returns weightage * (cov*I - I*cov) with cov = x.T @ x."""
    n, d = x.shape
    itemsize = jnp.dtype(x.dtype).itemsize

    # ---- tile selection ----------------------------------------------------
    tn = _pick_reduction_tile(n)           # reduction tile (rows of x / step)
    n_pad = _round_up(n, tn)

    d_pad = _round_up(d, 128)              # 128-lane granule
    # Row tile: 256-aligned for the 2x256^2 MXU when D is large, but capped so
    # the "parallel" i axis keeps >= 2 tiles (v7x dual-TensorCore) when D >= 256.
    tdi = 256 if (d_pad % 256 == 0 and d_pad >= 512) else 128
    # Column tile: wide so each strided row chunk of a column-slice DMA stays
    # >= 1 KiB contiguous.
    if d_pad % 512 == 0 and d_pad >= 512:
        tdj = 512
    elif d_pad % 256 == 0 and d_pad >= 256:
        tdj = 256
    else:
        tdj = 128

    d_tiles_i = d_pad // tdi
    d_tiles_j = d_pad // tdj
    n_tiles = n_pad // tn

    # ---- pad x (zero rows/cols do not change x.T @ x; padded output rows /
    # cols are sliced off below) ---------------------------------------------
    if (n_pad, d_pad) != (n, d):
        x = jnp.pad(x, ((0, n_pad - n), (0, d_pad - d)))

    compute_dtype = jnp.bfloat16 if x.dtype == jnp.float32 else x.dtype

    # Single-pass case (D fits in one row AND one column tile): the lhs and rhs
    # blocks are the identical (tn, D) slab — stream it once and reuse the same
    # VMEM ref for both dot operands (halves HBM read traffic).
    dedup = (d_tiles_i == 1) and (d_tiles_j == 1)

    body = functools.partial(_sparse_cov_kernel, tdi=tdi, tdj=tdj,
                             compute_dtype=compute_dtype)

    w_spec = pl.BlockSpec(memory_space=pltpu.MemorySpace.SMEM)
    if dedup:
        kernel = lambda w, xx, o, acc: body(w, xx, xx, o, acc)
        x_specs = [pl.BlockSpec((tn, d_pad), lambda i, j, k: (k, 0))]
        x_args = (x,)
        x_stream_bytes = 2 * tn * d_pad * itemsize              # double-buffered
    else:
        kernel = body
        x_specs = [
            pl.BlockSpec((tn, tdi), lambda i, j, k: (k, i)),     # lhs column blk
            pl.BlockSpec((tn, tdj), lambda i, j, k: (k, j)),     # rhs column blk
        ]
        x_args = (x, x)
        x_stream_bytes = 2 * tn * (tdi + tdj) * itemsize

    # ---- VMEM budget: double-buffered x stream(s) + f32 accumulator +
    # double-buffered f32 output block.  Never below the requirement; ceiling
    # 48 MiB is safe on v7x (64 MiB physical) and conservative on v5e/v6e.
    vmem_needed = x_stream_bytes + (tdi * tdj * 4) + 2 * (tdi * tdj * 4)
    vmem_limit = min(max(int(vmem_needed * 1.5), 8 * 1024 * 1024),
                     48 * 1024 * 1024)
    vmem_limit = max(vmem_limit, int(vmem_needed))

    w_arr = jnp.asarray([weightage], dtype=jnp.float32)

    out = pl.pallas_call(
        kernel,
        out_shape=jax.ShapeDtypeStruct((d_pad, d_pad), jnp.float32),
        grid_spec=pltpu.PrefetchScalarGridSpec(
            num_scalar_prefetch=0,
            grid=(d_tiles_i, d_tiles_j, n_tiles),       # reduction innermost
            in_specs=[w_spec] + x_specs,
            out_specs=pl.BlockSpec((tdi, tdj), lambda i, j, k: (i, j)),
            scratch_shapes=[pltpu.VMEM((tdi, tdj), jnp.float32)],
        ),
        compiler_params=pltpu.CompilerParams(
            dimension_semantics=("parallel", "parallel", "arbitrary"),
            vmem_limit_bytes=vmem_limit,
        ),
    )(w_arr, *x_args)

    if (n_pad, d_pad) != (n, d):
        out = out[:d, :d]
    return out


if __name__ == "__main__":
    key = jax.random.PRNGKey(0)
    weightage = 0.5            # module hyperparameter

    # Primary small case: x is (N, D) = (256, 128).
    N, D = 256, 128
    x = jax.random.normal(key, (N, D), dtype=jnp.float32)
    out = jax.block_until_ready(sparse_covariance(x, weightage))

    cov = x.T @ x
    eye = jnp.eye(D, dtype=jnp.float32)
    ref = weightage * (cov * eye - eye * cov)
    assert out.shape == (D, D)
    assert jnp.allclose(out, ref, atol=1e-5), "mismatch vs reference (256,128)"

    # Ragged case: exercises the wrapper pad/slice path and multi-step reduction.
    x2 = jax.random.normal(jax.random.PRNGKey(0), (100, 96), dtype=jnp.float32)
    out2 = jax.block_until_ready(sparse_covariance(x2, weightage))
    cov2 = x2.T @ x2
    eye2 = jnp.eye(96, dtype=jnp.float32)
    ref2 = weightage * (cov2 * eye2 - eye2 * cov2)
    assert out2.shape == (96, 96)
    assert jnp.allclose(out2, ref2, atol=1e-5), "mismatch vs reference (100,96)"

    print("KERNEL_OK")
</pallas_src>

<mosaic_0001>
module attributes {stable_mosaic.version = 11 : i64} {
  func.func @_lambda_(%arg0: i32, %arg1: i32, %arg2: i32, %arg3: memref<1xf32, #tpu.memory_space<smem>>, %arg4: memref<256x128xf32, #tpu.memory_space<vmem>>, %arg5: memref<128x128xf32, #tpu.memory_space<vmem>>, %arg6: memref<128x128xf32, #tpu.memory_space<vmem>>) attributes {dimension_semantics = [#tpu.dimension_semantics<parallel>, #tpu.dimension_semantics<parallel>, #tpu.dimension_semantics<arbitrary>], iteration_bounds = array<i64: 1, 1, 1>, scalar_prefetch = 0 : i64, scratch_operands = 1 : i64, tpu.core_type = #tpu.core_type<tc>, window_params = [{transform_indices = @transform_0, window_bounds = array<i64: 1>}, {transform_indices = @transform_1, window_bounds = array<i64: 256, 128>}, {transform_indices = @transform_2, window_bounds = array<i64: 128, 128>}]} {
    %c0_i32 = arith.constant 0 : i32
    %0 = arith.cmpi eq, %arg2, %c0_i32 : i32
    %1 = arith.extui %0 : i1 to i32
    %c0_i32_0 = arith.constant 0 : i32
    %2 = arith.cmpi ne, %1, %c0_i32_0 : i32
    scf.if %2 {
      %cst_14 = arith.constant 0.000000e+00 : f32
      %26 = vector.broadcast %cst_14 : f32 to vector<128x128xf32>
      %c0_15 = arith.constant 0 : index
      %c0_16 = arith.constant 0 : index
      %27 = vector.load %arg6[%c0_15, %c0_16] : memref<128x128xf32, #tpu.memory_space<vmem>>, vector<128x128xf32>
      tpu.vector_store %arg6[%c0_15, %c0_16], %26 {strides = array<i32>} : memref<128x128xf32, #tpu.memory_space<vmem>>, vector<128x128xf32>,
    } else {
    }
    %c0 = arith.constant 0 : index
    %c0_1 = arith.constant 0 : index
    %3 = vector.load %arg4[%c0, %c0_1] : memref<256x128xf32, #tpu.memory_space<vmem>>, vector<256x128xf32>
    %4 = arith.truncf %3 : vector<256x128xf32> to vector<256x128xbf16>
    %c0_2 = arith.constant 0 : index
    %c0_3 = arith.constant 0 : index
    %5 = vector.load %arg4[%c0_2, %c0_3] : memref<256x128xf32, #tpu.memory_space<vmem>>, vector<256x128xf32>
    %6 = arith.truncf %5 : vector<256x128xf32> to vector<256x128xbf16>
    %c0_4 = arith.constant 0 : index
    %c0_5 = arith.constant 0 : index
    %7 = vector.load %arg6[%c0_4, %c0_5] : memref<128x128xf32, #tpu.memory_space<vmem>>, vector<128x128xf32>
    %cst = arith.constant dense<0.000000e+00> : vector<128x128xf32>
    %8 = tpu.matmul %4, %6, %cst {dimension_numbers = #tpu.dot_dimension_numbers<[0], [0], [1], [1], [0, 1, 1, 1], [], []>} : vector<256x128xbf16>, vector<256x128xbf16>, vector<128x128xf32> -> vector<128x128xf32>
    %9 = arith.addf %7, %8 : vector<128x128xf32>
    %c0_6 = arith.constant 0 : index
    %c0_7 = arith.constant 0 : index
    %10 = vector.load %arg6[%c0_6, %c0_7] : memref<128x128xf32, #tpu.memory_space<vmem>>, vector<128x128xf32>
    tpu.vector_store %arg6[%c0_6, %c0_7], %9 {strides = array<i32>} : memref<128x128xf32, #tpu.memory_space<vmem>>, vector<128x128xf32>,
    %c0_i32_8 = arith.constant 0 : i32
    %11 = arith.cmpi eq, %arg2, %c0_i32_8 : i32
    %c128_i32 = arith.constant 128 : i32
    %12 = arith.muli %arg0, %c128_i32 : i32
    %c128_i32_9 = arith.constant 128 : i32
    %13 = arith.muli %arg1, %c128_i32_9 : i32
    %c128_i32_10 = arith.constant 128 : i32
    %14 = arith.addi %13, %c128_i32_10 : i32
    %15 = arith.cmpi slt, %12, %14 : i32
    %c128_i32_11 = arith.constant 128 : i32
    %16 = arith.addi %12, %c128_i32_11 : i32
    %17 = arith.cmpi slt, %13, %16 : i32
    %18 = arith.andi %15, %17 : i1
    %19 = arith.andi %11, %18 : i1
    %20 = arith.extui %19 : i1 to i32
    %c0_i32_12 = arith.constant 0 : i32
    %21 = arith.cmpi ne, %20, %c0_i32_12 : i32
    scf.if %21 {
      %c0_14 = arith.constant 0 : index
      %c0_15 = arith.constant 0 : index
      %26 = vector.load %arg6[%c0_14, %c0_15] : memref<128x128xf32, #tpu.memory_space<vmem>>, vector<128x128xf32>
      %27 = tpu.iota {dimensions = array<i32: 0>} : vector<128x128xi32>
      %28 = vector.broadcast %12 : i32 to vector<128x128xi32>
      %29 = arith.addi %27, %28 : vector<128x128xi32>
      %30 = tpu.iota {dimensions = array<i32: 1>} : vector<128x128xi32>
      %31 = vector.broadcast %13 : i32 to vector<128x128xi32>
      %32 = arith.addi %30, %31 : vector<128x128xi32>
      %33 = arith.cmpi eq, %29, %32 : vector<128x128xi32>
      %34 = arith.extui %33 : vector<128x128xi1> to vector<128x128xi32>
      %35 = arith.sitofp %34 : vector<128x128xi32> to vector<128x128xf32>
      %36 = arith.mulf %26, %35 : vector<128x128xf32>
      %c0_16 = arith.constant 0 : index
      %37 = memref.load %arg3[%c0_16] : memref<1xf32, #tpu.memory_space<smem>>
      %38 = arith.subf %36, %36 : vector<128x128xf32>
      %39 = vector.broadcast %37 : f32 to vector<128x128xf32>
      %40 = arith.mulf %39, %38 : vector<128x128xf32>
      %c0_17 = arith.constant 0 : index
      %c0_18 = arith.constant 0 : index
      %41 = vector.load %arg5[%c0_17, %c0_18] : memref<128x128xf32, #tpu.memory_space<vmem>>, vector<128x128xf32>
      tpu.vector_store %arg5[%c0_17, %c0_18], %40 {strides = array<i32>} : memref<128x128xf32, #tpu.memory_space<vmem>>, vector<128x128xf32>,
    } else {
    }
    %true = arith.constant true
    %22 = arith.xori %18, %true : i1
    %23 = arith.andi %11, %22 : i1
    %24 = arith.extui %23 : i1 to i32
    %c0_i32_13 = arith.constant 0 : i32
    %25 = arith.cmpi ne, %24, %c0_i32_13 : i32
    scf.if %25 {
      %cst_14 = arith.constant 0.000000e+00 : f32
      %26 = vector.broadcast %cst_14 : f32 to vector<128x128xf32>
      %c0_15 = arith.constant 0 : index
      %c0_16 = arith.constant 0 : index
      %27 = vector.load %arg5[%c0_15, %c0_16] : memref<128x128xf32, #tpu.memory_space<vmem>>, vector<128x128xf32>
      tpu.vector_store %arg5[%c0_15, %c0_16], %26 {strides = array<i32>} : memref<128x128xf32, #tpu.memory_space<vmem>>, vector<128x128xf32>,
    } else {
    }
    return
  }
  func.func @transform_0(%arg0: i32, %arg1: i32, %arg2: i32) -> i32 {
    %c0_i32 = arith.constant 0 : i32
    %c0_i32_0 = arith.constant 0 : i32
    return %c0_i32 : i32
  }
  func.func @transform_1(%arg0: i32, %arg1: i32, %arg2: i32) -> (i32, i32) {
    %c0_i32 = arith.constant 0 : i32
    %c0_i32_0 = arith.constant 0 : i32
    return %arg2, %c0_i32 : i32, i32
  }
  func.func @transform_2(%arg0: i32, %arg1: i32, %arg2: i32) -> (i32, i32) {
    %c0_i32 = arith.constant 0 : i32
    return %arg0, %arg1 : i32, i32
  }
}

</mosaic_0001>

<llo_original>
// kernel: tpu_custom_call.1
$region0: #{tpu_custom_call.1}
  #allocation0 [shape = 'u32[]', space=smem, size = 0x4, offset = 0x4, fixed_abs, tag = 'smem constant byte address 0x4 - core index']
  #allocation1 [shape = 'u32[144,128]{1,0:T(1,128)}', space=vmem, size = 0x12000, scoped, tag = 'internal scratch']
  #allocation2 [shape = 'f32[128,128]{1,0:T(8,128)}', space=vmem, size = 0x10000, scoped, tag = 'scratch operand']
  #allocation3 [shape = 'f32[1]{0:T(128)S(6)}', space=smem, size = 0x200, scoped, tag = 'scoped memory for tpu_custom_call.1']
  %s0 = inlined_call_operand.<no memory space> [shape: f32[1], index: 0, kind: input, shape index: {}]
  %s1 = inlined_call_operand.hbm [shape: f32[256,128], index: 1, kind: input, shape index: {}]
  %s2 = inlined_call_operand.hbm [shape: f32[128,128], index: 2, kind: output, shape index: {}]
  %s3 = sld [smem:[#allocation0]]
  $region34: #{tpu_custom_call.1} parent=0
    _
  %s5 = ssub.s32 1, %s3
  %s6 = scalar_select 0, %s5, %s3
  %7 = sst [smem:[#allocation3]] %s0
  $region1: #{tpu_custom_call.1} parent=0
    #allocation4 [shape = 'u8[131072]{0}', space=vmem, size = 0x20000, scoped, tag = 'input window, operand 1, single buffered']
    #allocation5 [shape = 's32[1]{0}', space=sflag, size = 0x4, scoped, tag = 'scoped memory for tpu_custom_call.1']
    #allocation6 [shape = 's32[1]{0}', space=sflag, size = 0x4, scoped, tag = 'scoped memory for tpu_custom_call.1']
    #allocation7 [shape = 'u8[65536]{0}', space=vmem, size = 0x10000, scoped, tag = 'output window, operand 0, single buffered']
    %8 = vsyncpa [#allocation5], 0
    %9 = vsyncpa [#allocation6], 0
    // Predicated region
    $region2: #{tpu_custom_call.1} parent=1 // pred_check
      _
    $region3: #{tpu_custom_call.1} parent=1 // pred_check_branch
      %11 = sbr.rel (0) target = $region5
    $region4: #{tpu_custom_call.1} parent=1 // pred_region
      _
    $region5: #{tpu_custom_call.1} parent=1 // pred_fallthru
      _
    // Predicated region
    $region6: #{tpu_custom_call.1} parent=1 // pred_check
      _
    $region7: #{tpu_custom_call.1} parent=1 // pred_check_branch
      %13 = sbr.rel (0) target = $region9
    $region8: #{tpu_custom_call.1} parent=1 // pred_region
      %s15 = ssub.s32 4096, 4096
      %16 = vsyncadd [#allocation5], %s15
      %s17 = sshll.u32 [#allocation4], 4
      %s18 = int_to_ptr.vmem [resolvable:$true] %s17
      %23 = dma.hbm_to_vmem [thread:$0]  %s1, 4096, %s18, [#allocation5], 128, 128, 8
    $region9: #{tpu_custom_call.1} parent=1 // pred_fallthru
      _
    // Predicated region
    $region10: #{tpu_custom_call.1} parent=1 // pred_check
      _
    $region11: #{tpu_custom_call.1} parent=1 // pred_check_branch
      %25 = sbr.rel (0) target = $region13
    $region12: #{tpu_custom_call.1} parent=1 // pred_region
      %26 = dma.done [#allocation5], 4096
    $region13: #{tpu_custom_call.1} parent=1 // pred_fallthru
      _
    %p28 = scmp.eq.s32.totalorder 0, 0
    // Predicated region
    $region14: #{tpu_custom_call.1} parent=1 // pred_check
      %p29 = pneg %p28
    $region15: #{tpu_custom_call.1} parent=1 // pred_check_branch
      %31 = sbr.rel (%p29) target = $region17
    $region16: #{tpu_custom_call.1} parent=1 // pred_region
      %32 = vst [vmem:[#allocation2] sm:$0xff] 0.0
      %33 = vst [vmem:[#allocation2 + $0x8] sm:$0xff] 0.0
      %34 = vst [vmem:[#allocation2 + $0x10] sm:$0xff] 0.0
      %35 = vst [vmem:[#allocation2 + $0x18] sm:$0xff] 0.0
      %36 = vst [vmem:[#allocation2 + $0x20] sm:$0xff] 0.0
      %37 = vst [vmem:[#allocation2 + $0x28] sm:$0xff] 0.0
      %38 = vst [vmem:[#allocation2 + $0x30] sm:$0xff] 0.0
      %39 = vst [vmem:[#allocation2 + $0x38] sm:$0xff] 0.0
      %40 = vst [vmem:[#allocation2 + $0x40] sm:$0xff] 0.0
      %41 = vst [vmem:[#allocation2 + $0x48] sm:$0xff] 0.0
      %42 = vst [vmem:[#allocation2 + $0x50] sm:$0xff] 0.0
      %43 = vst [vmem:[#allocation2 + $0x58] sm:$0xff] 0.0
      %44 = vst [vmem:[#allocation2 + $0x60] sm:$0xff] 0.0
      %45 = vst [vmem:[#allocation2 + $0x68] sm:$0xff] 0.0
      %46 = vst [vmem:[#allocation2 + $0x70] sm:$0xff] 0.0
      %47 = vst [vmem:[#allocation2 + $0x78] sm:$0xff] 0.0
    $region17: #{tpu_custom_call.1} parent=1 // pred_fallthru
      _
    %v48 = vld [vmem:[#allocation4] sm:$0xff]
    %v49 = vld [vmem:[#allocation4 + $0x8] sm:$0xff]
    %v50 = vld [vmem:[#allocation4 + $0x10] sm:$0xff]
    %v51 = vld [vmem:[#allocation4 + $0x18] sm:$0xff]
    %v52 = vld [vmem:[#allocation4 + $0x20] sm:$0xff]
    %v53 = vld [vmem:[#allocation4 + $0x28] sm:$0xff]
    %v54 = vld [vmem:[#allocation4 + $0x30] sm:$0xff]
    %v55 = vld [vmem:[#allocation4 + $0x38] sm:$0xff]
    %v56 = vld [vmem:[#allocation4 + $0x40] sm:$0xff]
    %v57 = vld [vmem:[#allocation4 + $0x48] sm:$0xff]
    %v58 = vld [vmem:[#allocation4 + $0x50] sm:$0xff]
    %v59 = vld [vmem:[#allocation4 + $0x58] sm:$0xff]
    %v60 = vld [vmem:[#allocation4 + $0x60] sm:$0xff]
    %v61 = vld [vmem:[#allocation4 + $0x68] sm:$0xff]
    %v62 = vld [vmem:[#allocation4 + $0x70] sm:$0xff]
    %v63 = vld [vmem:[#allocation4 + $0x78] sm:$0xff]
    %v64 = vld [vmem:[#allocation4 + $0x80] sm:$0xff]
    %v65 = vld [vmem:[#allocation4 + $0x88] sm:$0xff]
    %v66 = vld [vmem:[#allocation4 + $0x90] sm:$0xff]
    %v67 = vld [vmem:[#allocation4 + $0x98] sm:$0xff]
    %v68 = vld [vmem:[#allocation4 + $0xa0] sm:$0xff]
    %v69 = vld [vmem:[#allocation4 + $0xa8] sm:$0xff]
    %v70 = vld [vmem:[#allocation4 + $0xb0] sm:$0xff]
    %v71 = vld [vmem:[#allocation4 + $0xb8] sm:$0xff]
    %v72 = vld [vmem:[#allocation4 + $0xc0] sm:$0xff]
    %v73 = vld [vmem:[#allocation4 + $0xc8] sm:$0xff]
    %v74 = vld [vmem:[#allocation4 + $0xd0] sm:$0xff]
    %v75 = vld [vmem:[#allocation4 + $0xd8] sm:$0xff]
    %v76 = vld [vmem:[#allocation4 + $0xe0] sm:$0xff]
    %v77 = vld [vmem:[#allocation4 + $0xe8] sm:$0xff]
    %v78 = vld [vmem:[#allocation4 + $0xf0] sm:$0xff]
    %v79 = vld [vmem:[#allocation4 + $0xf8] sm:$0xff]
    %v80 = vpack.c.bf16 %v49, %v48
    %v81 = vpack.c.bf16 %v51, %v50
    %v82 = vpack.c.bf16 %v53, %v52
    %v83 = vpack.c.bf16 %v55, %v54
    %v84 = vpack.c.bf16 %v57, %v56
    %v85 = vpack.c.bf16 %v59, %v58
    %v86 = vpack.c.bf16 %v61, %v60
    %v87 = vpack.c.bf16 %v63, %v62
    %v88 = vpack.c.bf16 %v65, %v64
    %v89 = vpack.c.bf16 %v67, %v66
    %v90 = vpack.c.bf16 %v69, %v68
    %v91 = vpack.c.bf16 %v71, %v70
    %v92 = vpack.c.bf16 %v73, %v72
    %v93 = vpack.c.bf16 %v75, %v74
    %v94 = vpack.c.bf16 %v77, %v76
    %v95 = vpack.c.bf16 %v79, %v78
    %v96 = vld [vmem:[#allocation2] sm:$0xff]
    %v97 = vld [vmem:[#allocation2 + $0x8] sm:$0xff]
    %v98 = vld [vmem:[#allocation2 + $0x10] sm:$0xff]
    %v99 = vld [vmem:[#allocation2 + $0x18] sm:$0xff]
    %v100 = vld [vmem:[#allocation2 + $0x20] sm:$0xff]
    %v101 = vld [vmem:[#allocation2 + $0x28] sm:$0xff]
    %v102 = vld [vmem:[#allocation2 + $0x30] sm:$0xff]
    %v103 = vld [vmem:[#allocation2 + $0x38] sm:$0xff]
    %v104 = vld [vmem:[#allocation2 + $0x40] sm:$0xff]
    %v105 = vld [vmem:[#allocation2 + $0x48] sm:$0xff]
    %v106 = vld [vmem:[#allocation2 + $0x50] sm:$0xff]
    %v107 = vld [vmem:[#allocation2 + $0x58] sm:$0xff]
    %v108 = vld [vmem:[#allocation2 + $0x60] sm:$0xff]
    %v109 = vld [vmem:[#allocation2 + $0x68] sm:$0xff]
    %v110 = vld [vmem:[#allocation2 + $0x70] sm:$0xff]
    %v111 = vld [vmem:[#allocation2 + $0x78] sm:$0xff]
    %112 = vxpose.xlu0.c.b16.start [1/8] %v80, 128
    %113 = vxpose.xlu0.c.b16.cont [2/8] %v81, 128
    %114 = vxpose.xlu0.c.b16.cont [3/8] %v82, 128
    %115 = vxpose.xlu0.c.b16.cont [4/8] %v83, 128
    %116 = vxpose.xlu0.c.b16.cont [5/8] %v84, 128
    %117 = vxpose.xlu0.c.b16.cont [6/8] %v85, 128
    %118 = vxpose.xlu0.c.b16.cont [7/8] %v86, 128
    %119 = vxpose.xlu0.c.b16.end [8/8] %v87, 128
    %v120 = vpop.trf.xlu0
    %v121 = vpop.trf.xlu0
    %v122 = vpop.trf.xlu0
    %v123 = vpop.trf.xlu0
    %v124 = vpop.trf.xlu0
    %v125 = vpop.trf.xlu0
    %v126 = vpop.trf.xlu0
    %v127 = vpop.trf.xlu0
    %128 = vxpose.xlu0.c.b16.start [1/8] %v88, 128
    %129 = vxpose.xlu0.c.b16.cont [2/8] %v89, 128
    %130 = vxpose.xlu0.c.b16.cont [3/8] %v90, 128
    %131 = vxpose.xlu0.c.b16.cont [4/8] %v91, 128
    %132 = vxpose.xlu0.c.b16.cont [5/8] %v92, 128
    %133 = vxpose.xlu0.c.b16.cont [6/8] %v93, 128
    %134 = vxpose.xlu0.c.b16.cont [7/8] %v94, 128
    %135 = vxpose.xlu0.c.b16.end [8/8] %v95, 128
    %v136 = vpop.trf.xlu0
    %v137 = vpop.trf.xlu0
    %v138 = vpop.trf.xlu0
    %v139 = vpop.trf.xlu0
    %v140 = vpop.trf.xlu0
    %v141 = vpop.trf.xlu0
    %v142 = vpop.trf.xlu0
    %v143 = vpop.trf.xlu0
    %144 = vmatprep.subr.bf16.mxu0 0
    %145 = vmatpush1.bf16.msra.mxu0 %v87
    %146 = vmatprep.subr.bf16.mxu0 0
    %147 = vmatpush1.bf16.msra.mxu0 %v86
    %148 = vmatprep.subr.bf16.mxu0 0
    %149 = vmatpush1.bf16.msra.mxu0 %v85
    %150 = vmatprep.subr.bf16.mxu0 0
    %151 = vmatpush1.bf16.msra.mxu0 %v84
    %152 = vmatprep.subr.bf16.mxu0 0
    %153 = vmatpush1.bf16.msra.mxu0 %v83
    %154 = vmatprep.subr.bf16.mxu0 0
    %155 = vmatpush1.bf16.msra.mxu0 %v82
    %156 = vmatprep.subr.bf16.mxu0 0
    %157 = vmatpush1.bf16.msra.mxu0 %v81
    %158 = vmatprep.subr.bf16.mxu0 0
    %159 = vmatpush1.bf16.msra.mxu0 %v80
    %160 = vmatprep.subr.bf16.mxu0 0
    %161 = vmatpush2.bf16.msra.mxu0 %v95
    %162 = vmatprep.subr.bf16.mxu0 0
    %163 = vmatpush2.bf16.msra.mxu0 %v94
    %164 = vmatprep.subr.bf16.mxu0 0
    %165 = vmatpush2.bf16.msra.mxu0 %v93
    %166 = vmatprep.subr.bf16.mxu0 0
    %167 = vmatpush2.bf16.msra.mxu0 %v92
    %168 = vmatprep.subr.bf16.mxu0 0
    %169 = vmatpush2.bf16.msra.mxu0 %v91
    %170 = vmatprep.subr.bf16.mxu0 0
    %171 = vmatpush2.bf16.msra.mxu0 %v90
    %172 = vmatprep.subr.bf16.mxu0 0
    %173 = vmatpush2.bf16.msra.mxu0 %v89
    %174 = vmatprep.subr.bf16.mxu0 0
    %175 = vmatpush2.bf16.msra.mxu0 %v88
    %176 = vmatprep.mubr.bf16.mxu0 %v136
    %177 = vmatmul.mubr.bf16.gmra.mxu0 %v120
    %v178 = vpop.f32.mrf.mxu0
    %v179 = vadd.f32 0.0, %v178
    %v180 = vpop.f32.mrf.mxu0
    %v181 = vpop.f32.mrf.mxu0
    %v182 = vadd.f32 0.0, %v181
    %v183 = vpop.f32.mrf.mxu0
    %184 = vmatprep.mubr.bf16.mxu0 %v137
    %185 = vmatmul.mubr.bf16.gmra.mxu0 %v121
    %v186 = vpop.f32.mrf.mxu0
    %v187 = vadd.f32 0.0, %v186
    %v188 = vpop.f32.mrf.mxu0
    %v189 = vpop.f32.mrf.mxu0
    %v190 = vadd.f32 0.0, %v189
    %v191 = vpop.f32.mrf.mxu0
    %192 = vmatprep.mubr.bf16.mxu0 %v138
    %193 = vmatmul.mubr.bf16.gmra.mxu0 %v122
    %v194 = vpop.f32.mrf.mxu0
    %v195 = vadd.f32 0.0, %v194
    %v196 = vpop.f32.mrf.mxu0
    %v197 = vpop.f32.mrf.mxu0
    %v198 = vadd.f32 0.0, %v197
    %v199 = vpop.f32.mrf.mxu0
    %200 = vmatprep.mubr.bf16.mxu0 %v139
    %201 = vmatmul.mubr.bf16.gmra.mxu0 %v123
    %v202 = vpop.f32.mrf.mxu0
    %v203 = vadd.f32 0.0, %v202
    %v204 = vpop.f32.mrf.mxu0
    %v205 = vpop.f32.mrf.mxu0
    %v206 = vadd.f32 0.0, %v205
    %v207 = vpop.f32.mrf.mxu0
    %208 = vmatprep.mubr.bf16.mxu0 %v140
    %209 = vmatmul.mubr.bf16.gmra.mxu0 %v124
    %v210 = vpop.f32.mrf.mxu0
    %v211 = vadd.f32 0.0, %v210
    %v212 = vpop.f32.mrf.mxu0
    %v213 = vpop.f32.mrf.mxu0
    %v214 = vadd.f32 0.0, %v213
    %v215 = vpop.f32.mrf.mxu0
    %216 = vmatprep.mubr.bf16.mxu0 %v141
    %217 = vmatmul.mubr.bf16.gmra.mxu0 %v125
    %v218 = vpop.f32.mrf.mxu0
    %v219 = vadd.f32 0.0, %v218
    %v220 = vpop.f32.mrf.mxu0
    %v221 = vpop.f32.mrf.mxu0
    %v222 = vadd.f32 0.0, %v221
    %v223 = vpop.f32.mrf.mxu0
    %224 = vmatprep.mubr.bf16.mxu0 %v142
    %225 = vmatmul.mubr.bf16.gmra.mxu0 %v126
    %v226 = vpop.f32.mrf.mxu0
    %v227 = vadd.f32 0.0, %v226
    %v228 = vpop.f32.mrf.mxu0
    %v229 = vpop.f32.mrf.mxu0
    %v230 = vadd.f32 0.0, %v229
    %v231 = vpop.f32.mrf.mxu0
    %232 = vmatprep.mubr.bf16.mxu0 %v143
    %233 = vmatmul.mubr.bf16.gmra.mxu0 %v127
    %v234 = vpop.f32.mrf.mxu0
    %v235 = vadd.f32 0.0, %v234
    %v236 = vpop.f32.mrf.mxu0
    %v237 = vpop.f32.mrf.mxu0
    %v238 = vadd.f32 0.0, %v237
    %v239 = vpop.f32.mrf.mxu0
    %240 = vdwg.mxu0
    %v241 = vadd.f32 %v96, %v179
    %v242 = vadd.f32 %v97, %v182
    %v243 = vadd.f32 %v98, %v187
    %v244 = vadd.f32 %v99, %v190
    %v245 = vadd.f32 %v100, %v195
    %v246 = vadd.f32 %v101, %v198
    %v247 = vadd.f32 %v102, %v203
    %v248 = vadd.f32 %v103, %v206
    %v249 = vadd.f32 %v104, %v211
    %v250 = vadd.f32 %v105, %v214
    %v251 = vadd.f32 %v106, %v219
    %v252 = vadd.f32 %v107, %v222
    %v253 = vadd.f32 %v108, %v227
    %v254 = vadd.f32 %v109, %v230
    %v255 = vadd.f32 %v110, %v235
    %v256 = vadd.f32 %v111, %v238
    %257 = vst [vmem:[#allocation2] sm:$0xff] %v241
    %258 = vst [vmem:[#allocation2 + $0x8] sm:$0xff] %v242
    %259 = vst [vmem:[#allocation2 + $0x10] sm:$0xff] %v243
    %260 = vst [vmem:[#allocation2 + $0x18] sm:$0xff] %v244
    %261 = vst [vmem:[#allocation2 + $0x20] sm:$0xff] %v245
    %262 = vst [vmem:[#allocation2 + $0x28] sm:$0xff] %v246
    %263 = vst [vmem:[#allocation2 + $0x30] sm:$0xff] %v247
    %264 = vst [vmem:[#allocation2 + $0x38] sm:$0xff] %v248
    %265 = vst [vmem:[#allocation2 + $0x40] sm:$0xff] %v249
    %266 = vst [vmem:[#allocation2 + $0x48] sm:$0xff] %v250
    %267 = vst [vmem:[#allocation2 + $0x50] sm:$0xff] %v251
    %268 = vst [vmem:[#allocation2 + $0x58] sm:$0xff] %v252
    %269 = vst [vmem:[#allocation2 + $0x60] sm:$0xff] %v253
    %270 = vst [vmem:[#allocation2 + $0x68] sm:$0xff] %v254
    %271 = vst [vmem:[#allocation2 + $0x70] sm:$0xff] %v255
    %272 = vst [vmem:[#allocation2 + $0x78] sm:$0xff] %v256
    %s273 = smul.u32 0, 128
    %s274 = smul.u32 0, 128
    %s275 = sadd.s32 %s274, 128
    %p276 = scmp.lt.s32.totalorder %s273, %s275
    %s277 = sadd.s32 %s273, 128
    %p278 = scmp.lt.s32.totalorder %s274, %s277
    %p279 = pnand %p276, %p278
    %p280 = pneg %p279
    %p281 = pnand %p28, %p280
    %p282 = pneg %p281
    // Predicated region
    $region18: #{tpu_custom_call.1} parent=1 // pred_check
      _
    $region19: #{tpu_custom_call.1} parent=1 // pred_check_branch
      %284 = sbr.rel (%p281) target = $region21
    $region20: #{tpu_custom_call.1} parent=1 // pred_region
      %v285 = vld [vmem:[#allocation2] sm:$0xff]
      %v286 = vld [vmem:[#allocation2 + $0x8] sm:$0xff]
      %v287 = vld [vmem:[#allocation2 + $0x10] sm:$0xff]
      %v288 = vld [vmem:[#allocation2 + $0x18] sm:$0xff]
      %v289 = vld [vmem:[#allocation2 + $0x20] sm:$0xff]
      %v290 = vld [vmem:[#allocation2 + $0x28] sm:$0xff]
      %v291 = vld [vmem:[#allocation2 + $0x30] sm:$0xff]
      %v292 = vld [vmem:[#allocation2 + $0x38] sm:$0xff]
      %v293 = vld [vmem:[#allocation2 + $0x40] sm:$0xff]
      %v294 = vld [vmem:[#allocation2 + $0x48] sm:$0xff]
      %v295 = vld [vmem:[#allocation2 + $0x50] sm:$0xff]
      %v296 = vld [vmem:[#allocation2 + $0x58] sm:$0xff]
      %v297 = vld [vmem:[#allocation2 + $0x60] sm:$0xff]
      %v298 = vld [vmem:[#allocation2 + $0x68] sm:$0xff]
      %v299 = vld [vmem:[#allocation2 + $0x70] sm:$0xff]
      %v300 = vld [vmem:[#allocation2 + $0x78] sm:$0xff]
      %v301 = vlaneseq
      %v302 = vshrl.u32 %v301, 7
      %v303 = vadd.s32 %v302, 8
      %v304 = vadd.s32 %v302, 16
      %v305 = vadd.s32 %v302, 24
      %v306 = vadd.s32 %v302, 32
      %v307 = vadd.s32 %v302, 40
      %v308 = vadd.s32 %v302, 48
      %v309 = vadd.s32 %v302, 56
      %v310 = vadd.s32 %v302, 64
      %v311 = vadd.s32 %v302, 72
      %v312 = vadd.s32 %v302, 80
      %v313 = vadd.s32 %v302, 88
      %v314 = vadd.s32 %v302, 96
      %v315 = vadd.s32 %v302, 104
      %v316 = vadd.s32 %v302, 112
      %v317 = vadd.s32 %v302, 120
      %v318 = vstv %s273
      %v319 = vadd.s32 %v302, %v318
      %v320 = vadd.s32 %v303, %v318
      %v321 = vadd.s32 %v304, %v318
      %v322 = vadd.s32 %v305, %v318
      %v323 = vadd.s32 %v306, %v318
      %v324 = vadd.s32 %v307, %v318
      %v325 = vadd.s32 %v308, %v318
      %v326 = vadd.s32 %v309, %v318
      %v327 = vadd.s32 %v310, %v318
      %v328 = vadd.s32 %v311, %v318
      %v329 = vadd.s32 %v312, %v318
      %v330 = vadd.s32 %v313, %v318
      %v331 = vadd.s32 %v314, %v318
      %v332 = vadd.s32 %v315, %v318
      %v333 = vadd.s32 %v316, %v318
      %v334 = vadd.s32 %v317, %v318
      %v335 = vlaneseq
      %v336 = vand.u32 %v335, 127
      %v337 = vstv %s274
      %v338 = vadd.s32 %v336, %v337
      %vm339 = vcmp.eq.s32.totalorder %v319, %v338
      %vm340 = vcmp.eq.s32.totalorder %v320, %v338
      %vm341 = vcmp.eq.s32.totalorder %v321, %v338
      %vm342 = vcmp.eq.s32.totalorder %v322, %v338
      %vm343 = vcmp.eq.s32.totalorder %v323, %v338
      %vm344 = vcmp.eq.s32.totalorder %v324, %v338
      %vm345 = vcmp.eq.s32.totalorder %v325, %v338
      %vm346 = vcmp.eq.s32.totalorder %v326, %v338
      %vm347 = vcmp.eq.s32.totalorder %v327, %v338
      %vm348 = vcmp.eq.s32.totalorder %v328, %v338
      %vm349 = vcmp.eq.s32.totalorder %v329, %v338
      %vm350 = vcmp.eq.s32.totalorder %v330, %v338
      %vm351 = vcmp.eq.s32.totalorder %v331, %v338
      %vm352 = vcmp.eq.s32.totalorder %v332, %v338
      %vm353 = vcmp.eq.s32.totalorder %v333, %v338
      %vm354 = vcmp.eq.s32.totalorder %v334, %v338
      %v355 = vsel %vm339, 1, 0
      %v356 = vsel %vm340, 1, 0
      %v357 = vsel %vm341, 1, 0
      %v358 = vsel %vm342, 1, 0
      %v359 = vsel %vm343, 1, 0
      %v360 = vsel %vm344, 1, 0
      %v361 = vsel %vm345, 1, 0
      %v362 = vsel %vm346, 1, 0
      %v363 = vsel %vm347, 1, 0
      %v364 = vsel %vm348, 1, 0
      %v365 = vsel %vm349, 1, 0
      %v366 = vsel %vm350, 1, 0
      %v367 = vsel %vm351, 1, 0
      %v368 = vsel %vm352, 1, 0
      %v369 = vsel %vm353, 1, 0
      %v370 = vsel %vm354, 1, 0
      %v371 = vcvt.s32.f32 %v355
      %v372 = vcvt.s32.f32 %v356
      %v373 = vcvt.s32.f32 %v357
      %v374 = vcvt.s32.f32 %v358
      %v375 = vcvt.s32.f32 %v359
      %v376 = vcvt.s32.f32 %v360
      %v377 = vcvt.s32.f32 %v361
      %v378 = vcvt.s32.f32 %v362
      %v379 = vcvt.s32.f32 %v363
      %v380 = vcvt.s32.f32 %v364
      %v381 = vcvt.s32.f32 %v365
      %v382 = vcvt.s32.f32 %v366
      %v383 = vcvt.s32.f32 %v367
      %v384 = vcvt.s32.f32 %v368
      %v385 = vcvt.s32.f32 %v369
      %v386 = vcvt.s32.f32 %v370
      %v387 = vmul.f32 %v285, %v371
      %v388 = vmul.f32 %v286, %v372
      %v389 = vmul.f32 %v287, %v373
      %v390 = vmul.f32 %v288, %v374
      %v391 = vmul.f32 %v289, %v375
      %v392 = vmul.f32 %v290, %v376
      %v393 = vmul.f32 %v291, %v377
      %v394 = vmul.f32 %v292, %v378
      %v395 = vmul.f32 %v293, %v379
      %v396 = vmul.f32 %v294, %v380
      %v397 = vmul.f32 %v295, %v381
      %v398 = vmul.f32 %v296, %v382
      %v399 = vmul.f32 %v297, %v383
      %v400 = vmul.f32 %v298, %v384
      %v401 = vmul.f32 %v299, %v385
      %v402 = vmul.f32 %v300, %v386
      %s403 = sld [smem:[#allocation3]]
      %v404 = vsub.f32 %v387, %v387
      %v405 = vsub.f32 %v388, %v388
      %v406 = vsub.f32 %v389, %v389
      %v407 = vsub.f32 %v390, %v390
      %v408 = vsub.f32 %v391, %v391
      %v409 = vsub.f32 %v392, %v392
      %v410 = vsub.f32 %v393, %v393
      %v411 = vsub.f32 %v394, %v394
      %v412 = vsub.f32 %v395, %v395
      %v413 = vsub.f32 %v396, %v396
      %v414 = vsub.f32 %v397, %v397
      %v415 = vsub.f32 %v398, %v398
      %v416 = vsub.f32 %v399, %v399
      %v417 = vsub.f32 %v400, %v400
      %v418 = vsub.f32 %v401, %v401
      %v419 = vsub.f32 %v402, %v402
      %v420 = vstv %s403
      %v421 = vmul.f32 %v420, %v404
      %v422 = vmul.f32 %v420, %v405
      %v423 = vmul.f32 %v420, %v406
      %v424 = vmul.f32 %v420, %v407
      %v425 = vmul.f32 %v420, %v408
      %v426 = vmul.f32 %v420, %v409
      %v427 = vmul.f32 %v420, %v410
      %v428 = vmul.f32 %v420, %v411
      %v429 = vmul.f32 %v420, %v412
      %v430 = vmul.f32 %v420, %v413
      %v431 = vmul.f32 %v420, %v414
      %v432 = vmul.f32 %v420, %v415
      %v433 = vmul.f32 %v420, %v416
      %v434 = vmul.f32 %v420, %v417
      %v435 = vmul.f32 %v420, %v418
      %v436 = vmul.f32 %v420, %v419
      %437 = vst [vmem:[#allocation7] sm:$0xff] %v421
      %438 = vst [vmem:[#allocation7 + $0x8] sm:$0xff] %v422
      %439 = vst [vmem:[#allocation7 + $0x10] sm:$0xff] %v423
      %440 = vst [vmem:[#allocation7 + $0x18] sm:$0xff] %v424
      %441 = vst [vmem:[#allocation7 + $0x20] sm:$0xff] %v425
      %442 = vst [vmem:[#allocation7 + $0x28] sm:$0xff] %v426
      %443 = vst [vmem:[#allocation7 + $0x30] sm:$0xff] %v427
      %444 = vst [vmem:[#allocation7 + $0x38] sm:$0xff] %v428
      %445 = vst [vmem:[#allocation7 + $0x40] sm:$0xff] %v429
      %446 = vst [vmem:[#allocation7 + $0x48] sm:$0xff] %v430
      %447 = vst [vmem:[#allocation7 + $0x50] sm:$0xff] %v431
      %448 = vst [vmem:[#allocation7 + $0x58] sm:$0xff] %v432
      %449 = vst [vmem:[#allocation7 + $0x60] sm:$0xff] %v433
      %450 = vst [vmem:[#allocation7 + $0x68] sm:$0xff] %v434
      %451 = vst [vmem:[#allocation7 + $0x70] sm:$0xff] %v435
      %452 = vst [vmem:[#allocation7 + $0x78] sm:$0xff] %v436
    $region21: #{tpu_custom_call.1} parent=1 // pred_fallthru
      _
    %p453 = pneg %p280
    %p454 = pnand %p28, %p453
    %p455 = pneg %p454
    // Predicated region
    $region22: #{tpu_custom_call.1} parent=1 // pred_check
      _
    $region23: #{tpu_custom_call.1} parent=1 // pred_check_branch
      %457 = sbr.rel (%p454) target = $region25
    $region24: #{tpu_custom_call.1} parent=1 // pred_region
      %458 = vst [vmem:[#allocation7] sm:$0xff] 0.0
      %459 = vst [vmem:[#allocation7 + $0x8] sm:$0xff] 0.0
      %460 = vst [vmem:[#allocation7 + $0x10] sm:$0xff] 0.0
      %461 = vst [vmem:[#allocation7 + $0x18] sm:$0xff] 0.0
      %462 = vst [vmem:[#allocation7 + $0x20] sm:$0xff] 0.0
      %463 = vst [vmem:[#allocation7 + $0x28] sm:$0xff] 0.0
      %464 = vst [vmem:[#allocation7 + $0x30] sm:$0xff] 0.0
      %465 = vst [vmem:[#allocation7 + $0x38] sm:$0xff] 0.0
      %466 = vst [vmem:[#allocation7 + $0x40] sm:$0xff] 0.0
      %467 = vst [vmem:[#allocation7 + $0x48] sm:$0xff] 0.0
      %468 = vst [vmem:[#allocation7 + $0x50] sm:$0xff] 0.0
      %469 = vst [vmem:[#allocation7 + $0x58] sm:$0xff] 0.0
      %470 = vst [vmem:[#allocation7 + $0x60] sm:$0xff] 0.0
      %471 = vst [vmem:[#allocation7 + $0x68] sm:$0xff] 0.0
      %472 = vst [vmem:[#allocation7 + $0x70] sm:$0xff] 0.0
      %473 = vst [vmem:[#allocation7 + $0x78] sm:$0xff] 0.0
    $region25: #{tpu_custom_call.1} parent=1 // pred_fallthru
      _
    // Predicated region
    $region26: #{tpu_custom_call.1} parent=1 // pred_check
      _
    $region27: #{tpu_custom_call.1} parent=1 // pred_check_branch
      %475 = sbr.rel (0) target = $region29
    $region28: #{tpu_custom_call.1} parent=1 // pred_region
      %s477 = ssub.s32 2048, 2048
      %478 = vsyncadd [#allocation6], %s477
      %s479 = sshll.u32 [#allocation7], 4
      %s480 = int_to_ptr.vmem [resolvable:$true] %s479
      %485 = dma.vmem_to_hbm [thread:$0]  %s480, 2048, %s2, [#allocation6], 128, 128, 8
    $region29: #{tpu_custom_call.1} parent=1 // pred_fallthru
      _
    // Predicated region
    $region30: #{tpu_custom_call.1} parent=1 // pred_check
      _
    $region31: #{tpu_custom_call.1} parent=1 // pred_check_branch
      %487 = sbr.rel (0) target = $region33
    $region32: #{tpu_custom_call.1} parent=1 // pred_region
      %488 = dma.done [#allocation6], 2048
    $region33: #{tpu_custom_call.1} parent=1 // pred_fallthru
      _
    %489 = vsyncpa [#allocation5], 1
    %490 = vsyncpa [#allocation6], 1

</llo_original>
